<compile_context>
chip_gen: v7x
topology: tpu7x:2x2x1
jax: 0.10.0
libtpu: 0.0.40
codegen_flags: <defaults>
</compile_context>

<pallas_src>
import jax
import jax.numpy as jnp
import numpy as np
from jax import lax
from jax.experimental import pallas as pl
from jax.experimental.pallas import tpu as pltpu


def _log_loss_rb_kernel(r_tab_ref, sr_tab_ref,   # scalar prefetch (SMEM, int32 (R,))
                        wb_ref, reg_ref,          # SMEM f32: (R,) weights, (1,) regularizer
                        key_ref, j_ref,           # VMEM: (1, CW) resident key, (1, q, CW) r-slab
                        out_ref):                 # VMEM: (1, R) resident output block
    step = pl.program_id(0)
    r = r_tab_ref[step]          # position index for this grid step
    sig_r = sr_tab_ref[step]     # observed amino acid at position r
    wb = wb_ref[step]            # sequence weight
    reg = reg_ref[0]             # L2 regularizer (constant across steps)

    # Output block is resident across the (sequential) grid; HBM write-back
    # happens once after the last step.
    @pl.when(step == 0)
    def _():
        out_ref[...] = jnp.zeros_like(out_ref)

    slab = j_ref[0]              # (q, q*L+1): [a, b*L+i] = J[a,b,r,i]; last col = H[a,r]
    key = key_ref[...]           # (1, q*L+1) int32 selection key (see _build_column_key)

    # e[a] = H[a, r] + sum_{i != r} J[a, sigma_i[i], r, i]
    #   key >= 0  <=> J column matches sigma_i (or is the H column, key == L)
    #   key != r  excludes the i == r column (H column has key == L, never == r)
    sel = jnp.logical_and(key >= 0, key != r)                        # (1, CW) bool
    e = jnp.sum(jnp.where(sel, slab, 0.0), axis=1, keepdims=True)    # (q, 1) f32

    # Max-shifted log-sum-exp (same value as torch's exp/sum/log, numerically
    # safe; exp/log run on the EUP slot).
    q = e.shape[0]
    m = jnp.max(e)
    lse = m + jnp.log(jnp.sum(jnp.exp(e - m)))
    a_iota = lax.broadcasted_iota(jnp.int32, (q, 1), 0)
    e_sel = jnp.sum(jnp.where(a_iota == sig_r, e, 0.0))              # e[sigma_r]

    # NOTE: in the PyTorch module `pure_loss = Lpseudo` aliases the same
    # tensor and the in-place += of the regularizers mutates both, so the
    # module returns two identical (regularized) values.  Reproduced by
    # returning the regularized total per position.
    total = (lse - e_sel) * wb + reg

    lane = lax.broadcasted_iota(jnp.int32, out_ref.shape, 1)
    out_ref[...] = jnp.where(lane == step, total, out_ref[...])


def _build_column_key(sigma_i, q, L):
    """Selection key for the augmented r-slab columns, shape (1, q*L+1).

    Column c = b*L + i (a J column):    key[c] = i  if sigma_i[i] == b else -1
    Column q*L (the appended H column): key    = L  (always selected).
    In-kernel, (key >= 0) & (key != r) selects exactly
      { J columns with sigma_i[i] == b and i != r }  U  { the H column }.
    Depends only on sigma_i (the sequence), not on r.
    """
    c = jnp.arange(q * L, dtype=jnp.int32)
    b = c // L
    i = c % L
    match = jnp.asarray(sigma_i, jnp.int32)[i] == b
    key_j = jnp.where(match, i, jnp.int32(-1))
    key = jnp.concatenate([key_j, jnp.full((1,), L, jnp.int32)])
    return key.reshape(1, q * L + 1)


def _build_r_major_slabs(H, J, q, L):
    """(L, q, q*L+1) f32: slab[r, a, b*L+i] = J[a,b,r,i];  slab[r, a, q*L] = H[a, r].

    One-off layout change done by XLA in the wrapper; for training-style use
    this r-major copy should be maintained persistently, not rebuilt per call.
    """
    J4 = jnp.asarray(J, jnp.float32).reshape(q, q, L, L)
    Jr = jnp.transpose(J4, (2, 0, 1, 3)).reshape(L, q, q * L)
    Hr = jnp.transpose(jnp.asarray(H, jnp.float32))[:, :, None]      # (L, q, 1)
    return jnp.concatenate([Jr, Hr], axis=2)                          # (L, q, q*L+1)


def log_loss_rb_losses(H, J, sigma_i, r_tab, sigma_r_tab, w_b_tab,
                       *, q, L, lambda_h=0.01, lambda_j=0.01):
    """Batched LogLossRB: regularized loss for R positions in ONE launch.

    totals[k] = (-e[sigma_r_tab[k]] + logsumexp(e)) * w_b_tab[k] + reg, with e
    the per-amino-acid energies at position r_tab[k].  Each grid step DMAs
    only the (q, q*L+1) r-slab of J/H selected by the scalar-prefetched r_tab
    via a data-dependent BlockSpec index_map.
    """
    R = int(r_tab.shape[0])
    CW = q * L + 1

    Hf = jnp.asarray(H, jnp.float32)
    Jf = jnp.asarray(J, jnp.float32)
    slabs = _build_r_major_slabs(Hf, Jf, q, L)                        # (L, q, CW)
    key = _build_column_key(sigma_i, q, L)                            # (1, CW)
    reg = (lambda_h * jnp.sum(Hf * Hf) + lambda_j * jnp.sum(Jf * Jf)).reshape(1)

    grid_spec = pltpu.PrefetchScalarGridSpec(
        num_scalar_prefetch=2,            # r_tab, sigma_r_tab -> SMEM
        grid=(R,),
        in_specs=[
            pl.BlockSpec(memory_space=pltpu.MemorySpace.SMEM),        # w_b table
            pl.BlockSpec(memory_space=pltpu.MemorySpace.SMEM),        # regularizer
            pl.BlockSpec((1, CW), lambda i, r_ref, sr_ref: (0, 0)),   # key (resident)
            pl.BlockSpec((1, q, CW),
                         lambda i, r_ref, sr_ref: (r_ref[i], 0, 0)),  # r-slab of J (+H col)
        ],
        out_specs=pl.BlockSpec((1, R), lambda i, r_ref, sr_ref: (0, 0)),  # resident output
    )

    totals = pl.pallas_call(
        _log_loss_rb_kernel,
        out_shape=jax.ShapeDtypeStruct((1, R), jnp.float32),
        grid_spec=grid_spec,
        compiler_params=pltpu.CompilerParams(dimension_semantics=("arbitrary",)),
    )(jnp.asarray(r_tab, jnp.int32), jnp.asarray(sigma_r_tab, jnp.int32),
      jnp.asarray(w_b_tab, jnp.float32), reg, key, slabs)
    return totals.reshape(R)


def log_loss_rb_forward(H, J, sigma_r, sigma_i, sigma_ri, r, w_b,
                        *, q, L, lambda_h=0.01, lambda_j=0.01):
    """Exact equivalent of LogLossRB.forward for a single (r, sequence) call."""
    del sigma_ri  # redundant with sigma_i; the selector is rebuilt from sigma_i
    r_tab = jnp.reshape(jnp.asarray(r), (-1,))[:1].astype(jnp.int32)
    sr_tab = jnp.reshape(jnp.asarray(sigma_r), (-1,))[:1].astype(jnp.int32)
    wb_tab = jnp.reshape(jnp.asarray(w_b), (-1,))[:1].astype(jnp.float32)
    total = log_loss_rb_losses(H, J, sigma_i, r_tab, sr_tab, wb_tab,
                               q=q, L=L, lambda_h=lambda_h, lambda_j=lambda_j)[0]
    return total, total   # (Lpseudo, pure_loss) are aliased in the torch module


if __name__ == "__main__":
    q, L = 21, 16
    lambda_h, lambda_j = 0.01, 0.01

    master = jax.random.PRNGKey(0)
    kh, kj, ks, kr, kw = jax.random.split(master, 5)

    # Deterministic small-magnitude inits (module __init__ uses zeros; random
    # values here so every term of the loss is exercised).
    H = jax.random.normal(kh, (q, L), jnp.float32) * 0.05
    J = jax.random.normal(kj, (q * q, L * L), jnp.float32) * 0.05

    sigma_i = jax.random.randint(ks, (L,), 0, q, dtype=jnp.int32)   # sequence
    r = jax.random.randint(kr, (1,), 0, L, dtype=jnp.int32)         # position
    sigma_r = sigma_i[r]                                            # aa at r
    all_aa = jnp.arange(q, dtype=jnp.int32)
    sigma_ri = (all_aa[:, None] * q + sigma_i[None, :]).reshape(-1)
    w_b = jnp.array([0.7], jnp.float32)

    # 1) Single-position call, exactly matching the module's forward signature.
    lpseudo, pure_loss = log_loss_rb_forward(
        H, J, sigma_r, sigma_i, sigma_ri, r, w_b,
        q=q, L=L, lambda_h=lambda_h, lambda_j=lambda_j)

    # 2) Batched call: all L positions in one launch (one r-slab DMA per step).
    r_all = jnp.arange(L, dtype=jnp.int32)
    sr_all = sigma_i
    wb_all = jax.random.uniform(kw, (L,), jnp.float32, 0.5, 1.0)
    totals_all = log_loss_rb_losses(H, J, sigma_i, r_all, sr_all, wb_all,
                                    q=q, L=L, lambda_h=lambda_h, lambda_j=lambda_j)
    jax.block_until_ready((lpseudo, pure_loss, totals_all))

    # Host-side numpy reference of the PyTorch forward semantics.
    Hn = np.asarray(H, np.float64)
    Jn = np.asarray(J, np.float64).reshape(q, q, L, L)
    sig_np = np.asarray(sigma_i)
    reg_val = lambda_h * np.sum(Hn * Hn) + lambda_j * np.sum(Jn * Jn)

    def ref_total(r_i, sr, wb):
        j_l = np.zeros(q, np.float64)
        for i in range(L):
            if i != r_i:
                j_l += Jn[:, sig_np[i], r_i, i]
        e = Hn[:, r_i] + j_l
        pure = (-e[sr] + np.log(np.exp(e).sum())) * wb
        return pure + reg_val

    exp_single = ref_total(int(r[0]), int(sigma_r[0]), float(w_b[0]))
    np.testing.assert_allclose(float(lpseudo), exp_single, rtol=1e-4, atol=1e-5)
    np.testing.assert_allclose(float(pure_loss), exp_single, rtol=1e-4, atol=1e-5)

    exp_all = np.array([ref_total(i, int(sig_np[i]), float(np.asarray(wb_all)[i]))
                        for i in range(L)])
    np.testing.assert_allclose(np.asarray(totals_all), exp_all, rtol=1e-4, atol=1e-5)

    print("KERNEL_OK")
</pallas_src>

<mosaic_0001>
module attributes {stable_mosaic.version = 11 : i64} {
  func.func @_log_loss_rb_kernel(%arg0: i32, %arg1: memref<1xi32, #tpu.memory_space<smem>>, %arg2: memref<1xi32, #tpu.memory_space<smem>>, %arg3: memref<1xf32, #tpu.memory_space<smem>>, %arg4: memref<1xf32, #tpu.memory_space<smem>>, %arg5: memref<1x337xi32, #tpu.memory_space<vmem>>, %arg6: memref<1x21x337xf32, #tpu.memory_space<vmem>>, %arg7: memref<1x1xf32, #tpu.memory_space<vmem>>) attributes {dimension_semantics = [#tpu.dimension_semantics<arbitrary>], iteration_bounds = array<i64: 1>, scalar_prefetch = 2 : i64, scratch_operands = 0 : i64, tpu.core_type = #tpu.core_type<tc>, window_params = [{transform_indices = @transform_0, window_bounds = array<i64: 1>}, {transform_indices = @transform_1, window_bounds = array<i64: 1>}, {pipeline_mode = #tpu.pipeline_mode<synchronous>, transform_indices = @transform_2, window_bounds = array<i64: 1, 337>}, {transform_indices = @transform_3, window_bounds = array<i64: 1, 21, 337>}, {pipeline_mode = #tpu.pipeline_mode<synchronous>, transform_indices = @transform_4, window_bounds = array<i64: 1, 1>}]} {
    %0 = arith.index_cast %arg0 : i32 to index
    %1 = memref.load %arg1[%0] : memref<1xi32, #tpu.memory_space<smem>>
    %2 = arith.index_cast %arg0 : i32 to index
    %3 = memref.load %arg2[%2] : memref<1xi32, #tpu.memory_space<smem>>
    %4 = arith.index_cast %arg0 : i32 to index
    %5 = memref.load %arg3[%4] : memref<1xf32, #tpu.memory_space<smem>>
    %c0 = arith.constant 0 : index
    %6 = memref.load %arg4[%c0] : memref<1xf32, #tpu.memory_space<smem>>
    %c0_i32 = arith.constant 0 : i32
    %7 = arith.cmpi eq, %arg0, %c0_i32 : i32
    %8 = arith.extui %7 : i1 to i32
    %c0_i32_0 = arith.constant 0 : i32
    %9 = arith.cmpi ne, %8, %c0_i32_0 : i32
    scf.if %9 {
      %cst_16 = arith.constant 0.000000e+00 : f32
      %56 = vector.broadcast %cst_16 : f32 to vector<1x1xf32>
      %c0_17 = arith.constant 0 : index
      %c0_18 = arith.constant 0 : index
      %57 = vector.load %arg7[%c0_17, %c0_18] : memref<1x1xf32, #tpu.memory_space<vmem>>, vector<1x1xf32>
      tpu.vector_store %arg7[%c0_17, %c0_18], %56 {strides = array<i32>} : memref<1x1xf32, #tpu.memory_space<vmem>>, vector<1x1xf32>,
    } else {
    }
    %c0_1 = arith.constant 0 : index
    %c0_2 = arith.constant 0 : index
    %c0_3 = arith.constant 0 : index
    %10 = vector.load %arg6[%c0_1, %c0_2, %c0_3] : memref<1x21x337xf32, #tpu.memory_space<vmem>>, vector<1x21x337xf32>
    %11 = vector.shape_cast %10 : vector<1x21x337xf32> to vector<21x337xf32>
    %c0_4 = arith.constant 0 : index
    %c0_5 = arith.constant 0 : index
    %12 = vector.load %arg5[%c0_4, %c0_5] : memref<1x337xi32, #tpu.memory_space<vmem>>, vector<1x337xi32>
    %c0_i32_6 = arith.constant 0 : i32
    %13 = vector.broadcast %c0_i32_6 : i32 to vector<1x337xi32>
    %14 = arith.cmpi sge, %12, %13 : vector<1x337xi32>
    %15 = vector.broadcast %1 : i32 to vector<1x337xi32>
    %16 = arith.cmpi ne, %12, %15 : vector<1x337xi32>
    %17 = arith.andi %14, %16 : vector<1x337xi1>
    %cst = arith.constant 0.000000e+00 : f32
    %18 = vector.shape_cast %17 : vector<1x337xi1> to vector<1x337xi1>
    %19 = vector.broadcast %18 : vector<1x337xi1> to vector<21x337xi1>
    %20 = vector.broadcast %cst : f32 to vector<21x337xf32>
    %21 = arith.select %19, %11, %20 : vector<21x337xi1>, vector<21x337xf32>
    %cst_7 = arith.constant dense<0.000000e+00> : vector<21xf32>
    %22 = vector.multi_reduction <add>, %21, %cst_7 [1] : vector<21x337xf32> to vector<21xf32>
    %23 = vector.shape_cast %22 : vector<21xf32> to vector<21x1xf32>
    %24 = vector.shape_cast %23 : vector<21x1xf32> to vector<1x21x1xf32>
    %cst_8 = arith.constant dense<0xFF800000> : vector<1xf32>
    %25 = vector.multi_reduction <maximumf>, %24, %cst_8 [1, 2] : vector<1x21x1xf32> to vector<1xf32>
    %26 = vector.shape_cast %25 : vector<1xf32> to vector<1x1x1xf32>
    %27 = vector.extract %26[0, 0, 0] : f32 from vector<1x1x1xf32>
    %28 = vector.broadcast %27 : f32 to vector<21x1xf32>
    %29 = arith.subf %23, %28 : vector<21x1xf32>
    %30 = math.exp %29 : vector<21x1xf32>
    %31 = vector.shape_cast %30 : vector<21x1xf32> to vector<1x21x1xf32>
    %cst_9 = arith.constant dense<0.000000e+00> : vector<1xf32>
    %32 = vector.multi_reduction <add>, %31, %cst_9 [1, 2] : vector<1x21x1xf32> to vector<1xf32>
    %33 = vector.shape_cast %32 : vector<1xf32> to vector<1x1x1xf32>
    %34 = vector.extract %33[0, 0, 0] : f32 from vector<1x1x1xf32>
    %35 = math.log %34 : f32
    %36 = arith.addf %27, %35 : f32
    %37 = tpu.iota {dimensions = array<i32: 0>} : vector<21x1xi32>
    %38 = vector.broadcast %3 : i32 to vector<21x1xi32>
    %39 = arith.cmpi eq, %37, %38 : vector<21x1xi32>
    %cst_10 = arith.constant 0.000000e+00 : f32
    %40 = vector.broadcast %cst_10 : f32 to vector<21x1xf32>
    %41 = arith.select %39, %23, %40 : vector<21x1xi1>, vector<21x1xf32>
    %42 = vector.shape_cast %41 : vector<21x1xf32> to vector<1x21x1xf32>
    %cst_11 = arith.constant dense<0.000000e+00> : vector<1xf32>
    %43 = vector.multi_reduction <add>, %42, %cst_11 [1, 2] : vector<1x21x1xf32> to vector<1xf32>
    %44 = vector.shape_cast %43 : vector<1xf32> to vector<1x1x1xf32>
    %45 = vector.extract %44[0, 0, 0] : f32 from vector<1x1x1xf32>
    %46 = arith.subf %36, %45 : f32
    %47 = arith.mulf %46, %5 : f32
    %48 = arith.addf %47, %6 : f32
    %49 = tpu.iota {dimensions = array<i32: 1>} : vector<1x1xi32>
    %50 = vector.broadcast %arg0 : i32 to vector<1x1xi32>
    %51 = arith.cmpi eq, %49, %50 : vector<1x1xi32>
    %c0_12 = arith.constant 0 : index
    %c0_13 = arith.constant 0 : index
    %52 = vector.load %arg7[%c0_12, %c0_13] : memref<1x1xf32, #tpu.memory_space<vmem>>, vector<1x1xf32>
    %53 = vector.broadcast %48 : f32 to vector<1x1xf32>
    %54 = arith.select %51, %53, %52 : vector<1x1xi1>, vector<1x1xf32>
    %c0_14 = arith.constant 0 : index
    %c0_15 = arith.constant 0 : index
    %55 = vector.load %arg7[%c0_14, %c0_15] : memref<1x1xf32, #tpu.memory_space<vmem>>, vector<1x1xf32>
    tpu.vector_store %arg7[%c0_14, %c0_15], %54 {strides = array<i32>} : memref<1x1xf32, #tpu.memory_space<vmem>>, vector<1x1xf32>,
    return
  }
  func.func @transform_0(%arg0: i32, %arg1: memref<1xi32, #tpu.memory_space<smem>>, %arg2: memref<1xi32, #tpu.memory_space<smem>>) -> i32 {
    %c0_i32 = arith.constant 0 : i32
    %c0_i32_0 = arith.constant 0 : i32
    return %c0_i32 : i32
  }
  func.func @transform_1(%arg0: i32, %arg1: memref<1xi32, #tpu.memory_space<smem>>, %arg2: memref<1xi32, #tpu.memory_space<smem>>) -> i32 {
    %c0_i32 = arith.constant 0 : i32
    %c0_i32_0 = arith.constant 0 : i32
    return %c0_i32 : i32
  }
  func.func @transform_2(%arg0: i32, %arg1: memref<1xi32, #tpu.memory_space<smem>>, %arg2: memref<1xi32, #tpu.memory_space<smem>>) -> (i32, i32) {
    %c0_i32 = arith.constant 0 : i32
    %c0_i32_0 = arith.constant 0 : i32
    %c0_i32_1 = arith.constant 0 : i32
    return %c0_i32, %c0_i32_0 : i32, i32
  }
  func.func @transform_3(%arg0: i32, %arg1: memref<1xi32, #tpu.memory_space<smem>>, %arg2: memref<1xi32, #tpu.memory_space<smem>>) -> (i32, i32, i32) {
    %0 = arith.index_cast %arg0 : i32 to index
    %1 = memref.load %arg1[%0] : memref<1xi32, #tpu.memory_space<smem>>
    %c0_i32 = arith.constant 0 : i32
    %c0_i32_0 = arith.constant 0 : i32
    %c0_i32_1 = arith.constant 0 : i32
    return %1, %c0_i32, %c0_i32_0 : i32, i32, i32
  }
  func.func @transform_4(%arg0: i32, %arg1: memref<1xi32, #tpu.memory_space<smem>>, %arg2: memref<1xi32, #tpu.memory_space<smem>>) -> (i32, i32) {
    %c0_i32 = arith.constant 0 : i32
    %c0_i32_0 = arith.constant 0 : i32
    %c0_i32_1 = arith.constant 0 : i32
    return %c0_i32, %c0_i32_0 : i32, i32
  }
}

</mosaic_0001>

<llo_original>
// kernel: tpu_custom_call.1
$region0: #{tpu_custom_call.1}
  #allocation0 [shape = 'u32[]', space=smem, size = 0x4, offset = 0x4, fixed_abs, tag = 'smem constant byte address 0x4 - core index']
  #allocation1 [shape = 'u32[144,128]{1,0:T(1,128)}', space=vmem, size = 0x12000, scoped, tag = 'internal scratch']
  #allocation2 [shape = 's32[1]{0}', space=sflag, size = 0x4, scoped, tag = 'scoped memory for tpu_custom_call.1']
  #allocation3 [shape = 's32[1]{0:T(128)S(6)}', space=smem, size = 0x200, scoped, tag = 'prefetched SMEM operand 0']
  #allocation4 [shape = 's32[1]{0:T(128)S(6)}', space=smem, size = 0x200, scoped, tag = 'prefetched SMEM operand 1']
  #allocation5 [shape = 'f32[1]{0:T(128)S(6)}', space=smem, size = 0x200, scoped, tag = 'scoped memory for tpu_custom_call.1']
  #allocation6 [shape = 'f32[1]{0:T(128)S(6)}', space=smem, size = 0x200, scoped, tag = 'scoped memory for tpu_custom_call.1']
  %s0 = inlined_call_operand.<no memory space> [shape: s32[1], index: 0, kind: input, shape index: {}]
  %s1 = inlined_call_operand.<no memory space> [shape: s32[1], index: 1, kind: input, shape index: {}]
  %s2 = inlined_call_operand.<no memory space> [shape: f32[1], index: 2, kind: input, shape index: {}]
  %s3 = inlined_call_operand.<no memory space> [shape: f32[1], index: 3, kind: input, shape index: {}]
  %s4 = inlined_call_operand.vmem [shape: s32[1,337], index: 4, kind: input, shape index: {}]
  %s5 = inlined_call_operand.vmem [shape: f32[16,21,337], index: 5, kind: input, shape index: {}]
  %s6 = inlined_call_operand.hbm [shape: f32[1,1], index: 6, kind: output, shape index: {}]
  %s7 = sld [smem:[#allocation0]]
  $region30: #{tpu_custom_call.1} parent=0
    _
  %s9 = ssub.s32 1, %s7
  %s10 = scalar_select 0, %s9, %s7
  %11 = sst [smem:[#allocation3]] %s0
  %12 = sst [smem:[#allocation4]] %s1
  %13 = sst [smem:[#allocation5]] %s2
  %14 = sst [smem:[#allocation6]] %s3
  $region1: #{tpu_custom_call.1} parent=0
    #allocation7 [shape = 'u8[512]{0}', space=vmem, size = 0x400, scoped, tag = 'output window, operand 0, single buffered']
    #allocation8 [shape = 's32[1]{0}', space=sflag, size = 0x4, scoped, tag = 'scoped memory for tpu_custom_call.1']
    %15 = vsyncpa [#allocation8], 0
    // Predicated region
    $region2: #{tpu_custom_call.1} parent=1 // pred_check
      _
    $region3: #{tpu_custom_call.1} parent=1 // pred_check_branch
      %17 = sbr.rel (0) target = $region5
    $region4: #{tpu_custom_call.1} parent=1 // pred_region
      _
    $region5: #{tpu_custom_call.1} parent=1 // pred_fallthru
      _
    // Predicated region
    $region6: #{tpu_custom_call.1} parent=1 // pred_check
      _
    $region7: #{tpu_custom_call.1} parent=1 // pred_check_branch
      %19 = sbr.rel (0) target = $region9
    $region8: #{tpu_custom_call.1} parent=1 // pred_region
      _
    $region9: #{tpu_custom_call.1} parent=1 // pred_fallthru
      _
    // Predicated region
    $region10: #{tpu_custom_call.1} parent=1 // pred_check
      _
    $region11: #{tpu_custom_call.1} parent=1 // pred_check_branch
      %21 = sbr.rel (0) target = $region13
    $region12: #{tpu_custom_call.1} parent=1 // pred_region
      _
    $region13: #{tpu_custom_call.1} parent=1 // pred_fallthru
      _
    // Predicated region
    $region14: #{tpu_custom_call.1} parent=1 // pred_check
      _
    $region15: #{tpu_custom_call.1} parent=1 // pred_check_branch
      %23 = sbr.rel (0) target = $region17
    $region16: #{tpu_custom_call.1} parent=1 // pred_region
      %s24 = sld [smem:[#allocation3]]
      %p25 = scmp.lt.s32.totalorder %s24, 15
      %s26 = scalar_select %p25, %s24, 15
      %s27 = smul.addr %s26, 9
      %s28 = smul.addr %s27, 8
      %s29 = scalar_lea.vmem %s5, %s28
      %s30 = sld [smem:[#allocation3]]
    $region17: #{tpu_custom_call.1} parent=1 // pred_fallthru
      _
    %s31 = sld [smem:[#allocation3]]
    %p32 = scmp.lt.s32.totalorder %s31, 15
    %s33 = scalar_select %p32, %s31, 15
    %s34 = smul.addr %s33, 9
    %s35 = smul.addr %s34, 8
    %s36 = scalar_lea.vmem %s5, %s35
    %s37 = sld [smem:[#allocation3]]
    %p38 = scmp.lt.s32.totalorder %s37, 15
    %s39 = scalar_select %p38, %s37, 15
    %s40 = smul.addr %s39, 9
    %s41 = smul.addr %s40, 8
    %s42 = scalar_lea.vmem %s5, %s41
    %s43 = sld [smem:[#allocation3]]
    %s44 = sld [smem:[#allocation3]]
    %s45 = sld [smem:[#allocation4]]
    %s46 = sld [smem:[#allocation5]]
    %s47 = sld [smem:[#allocation6]]
    %p48 = scmp.eq.s32.totalorder 0, 0
    // Predicated region
    $region18: #{tpu_custom_call.1} parent=1 // pred_check
      %p49 = pneg %p48
    $region19: #{tpu_custom_call.1} parent=1 // pred_check_branch
      %51 = sbr.rel (%p49) target = $region21
    $region20: #{tpu_custom_call.1} parent=1 // pred_region
      %vm52 = vcmask 0
      %53 = vst.msk [vmem:[#allocation7] sm:$0x1] %vm52, 0.0
    $region21: #{tpu_custom_call.1} parent=1 // pred_fallthru
      _
    %v54 = vld [vmem:[%s42] sm:$0xff]
    %v55 = vld [vmem:[%s42 + $0x8] sm:$0xff]
    %v56 = vld [vmem:[%s42 + $0x10] sm:$0xff]
    %v57 = vld [vmem:[%s42 + $0x18] sm:$0xff]
    %v58 = vld [vmem:[%s42 + $0x20] sm:$0xff]
    %v59 = vld [vmem:[%s42 + $0x28] sm:$0xff]
    %v60 = vld [vmem:[%s42 + $0x30] sm:$0x1f]
    %v61 = vld [vmem:[%s42 + $0x38] sm:$0x1f]
    %v62 = vld [vmem:[%s42 + $0x40] sm:$0x1f]
    %v63 = vld [vmem:[%s4] sm:$0x7]
    %vm64 = vcmp.ge.s32.totalorder %v63, 0
    %v65 = vstv %s44
    %vm66 = vcmp.ne.s32.totalorder %v63, %v65
    %vm67 = vmand %vm64, %vm66
    %v68 = vsel %vm67, 1, 0
    %v69 = vlaneseq
    %v70 = vshrl.u32 %v69, 7
    %v71 = vsub.s32 0, %v70
    %v72 = vrot.slane %v68, %v71
    %v73 = vlaneseq
    %v74 = vshrl.u32 %v73, 7
    %v75 = vsub.s32 1, %v74
    %v76 = vrot.slane %v68, %v75
    %v77 = vlaneseq
    %v78 = vshrl.u32 %v77, 7
    %v79 = vsub.s32 2, %v78
    %v80 = vrot.slane %v68, %v79
    %vm81 = vcmp.eq.s32.totalorder %v72, 1
    %vm82 = vcmp.eq.s32.totalorder %v76, 1
    %vm83 = vcmp.eq.s32.totalorder %v80, 1
    %v84 = vsel %vm81, %v54, 0.0
    %v85 = vsel %vm82, %v55, 0.0
    %v86 = vsel %vm83, %v56, 0.0
    %v87 = vsel %vm81, %v57, 0.0
    %v88 = vsel %vm82, %v58, 0.0
    %v89 = vsel %vm83, %v59, 0.0
    %v90 = vsel %vm81, %v60, 0.0
    %v91 = vsel %vm82, %v61, 0.0
    %v92 = vsel %vm83, %v62, 0.0
    %v93 = vadd.f32 %v84, %v85
    %vm94 = vcmask 662528
    %v95 = vsel %vm94, %v86, 0.0
    %v96 = vadd.f32 %v93, %v95
    %97 = vadd.xlane.f32.xlu0 %v96
    %v98 = vpop.xlane.xlu0 %97
    %v99 = vadd.f32 %v87, %v88
    %v100 = vsel %vm94, %v89, 0.0
    %v101 = vadd.f32 %v99, %v100
    %102 = vadd.xlane.f32.xlu0 %v101
    %v103 = vpop.xlane.xlu0 %102
    %vm104 = vcmask 1044480
    %v105 = vsel %vm104, %v90, 0.0
    %v106 = vsel %vm104, %v91, 0.0
    %v107 = vadd.f32 %v105, %v106
    %vm108 = vcmask 659456
    %v109 = vsel %vm108, %v92, 0.0
    %v110 = vadd.f32 %v107, %v109
    %111 = vadd.xlane.f32.xlu0 %v110
    %v112 = vpop.xlane.xlu0 %111
    %v113 = vsel %vm104, %v112, -inf
    %v114 = vmax.f32 %v98, %v103
    %v115 = vmax.f32 %v114, %v113
    %v116 = vrot.slane %v115, 4
    %v117 = vmax.f32 %v115, %v116
    %v118 = vrot.slane %v117, 2
    %v119 = vmax.f32 %v117, %v118
    %v120 = vrot.slane %v119, 1
    %v121 = vmax.f32 %v119, %v120
    %s122 = vtos %v121
    %v123 = vstv %s122
    %v124 = vsub.f32 %v98, %v123
    %v125 = vsub.f32 %v103, %v123
    %v126 = vsub.f32 %v112, %v123
    %v127 = vmul.f32 %v124, 1.442695
    %v128 = vpow.pop %v127
    %v129 = vmul.f32 %v125, 1.442695
    %v130 = vpow.pop %v129
    %v131 = vmul.f32 %v126, 1.442695
    %v132 = vpow.pop %v131
    %vm133 = vcmask 7168
    %v134 = vsel %vm133, %v128, 0.0
    %v135 = vsel %vm133, %v130, 0.0
    %v136 = vadd.f32 %v134, %v135
    %vm137 = vcmask 4096
    %v138 = vsel %vm137, %v132, 0.0
    %v139 = vadd.f32 %v136, %v138
    %140 = vadd.xlane.f32.xlu0 %v139
    %v141 = vpop.xlane.xlu0 %140
    %v142 = vrot.slane %v141, 4
    %v143 = vadd.f32 %v141, %v142
    %v144 = vrot.slane %v143, 2
    %v145 = vadd.f32 %v143, %v144
    %v146 = vrot.slane %v145, 1
    %v147 = vadd.f32 %v145, %v146
    %s148 = vtos %v147
    %v149 = vstv %s148
    %v150 = vlog2.pop %v149
    %v151 = vmul.f32 %v150, 0.6931472
    %s152 = vtos %v151
    %s153 = sadd.f32 %s122, %s152
    %v154 = vlaneseq
    %v155 = vshrl.u32 %v154, 7
    %v156 = vadd.s32 %v155, 8
    %v157 = vadd.s32 %v155, 16
    %v158 = vstv %s45
    %vm159 = vcmp.eq.s32.totalorder %v155, %v158
    %vm160 = vcmp.eq.s32.totalorder %v156, %v158
    %vm161 = vcmp.eq.s32.totalorder %v157, %v158
    %v162 = vsel %vm159, %v98, 0.0
    %v163 = vsel %vm160, %v103, 0.0
    %v164 = vsel %vm161, %v112, 0.0
    %v165 = vsel %vm133, %v162, 0.0
    %v166 = vsel %vm133, %v163, 0.0
    %v167 = vadd.f32 %v165, %v166
    %v168 = vsel %vm137, %v164, 0.0
    %v169 = vadd.f32 %v167, %v168
    %170 = vadd.xlane.f32.xlu0 %v169
    %v171 = vpop.xlane.xlu0 %170
    %v172 = vrot.slane %v171, 4
    %v173 = vadd.f32 %v171, %v172
    %v174 = vrot.slane %v173, 2
    %v175 = vadd.f32 %v173, %v174
    %v176 = vrot.slane %v175, 1
    %v177 = vadd.f32 %v175, %v176
    %s178 = vtos %v177
    %s179 = ssub.f32 %s153, %s178
    %s180 = smul.f32 %s179, %s46
    %s181 = sadd.f32 %s180, %s47
    %v182 = vlaneseq
    %v183 = vand.u32 %v182, 127
    %v184 = vstv 0
    %vm185 = vcmp.eq.s32.totalorder %v183, %v184
    %v186 = vld [vmem:[#allocation7] sm:$0x1]
    %v187 = vstv %s181
    %v188 = vsel %vm185, %v187, %v186
    %vm189 = vcmask 0
    %190 = vst.msk [vmem:[#allocation7] sm:$0x1] %vm189, %v188
    // Predicated region
    $region22: #{tpu_custom_call.1} parent=1 // pred_check
      _
    $region23: #{tpu_custom_call.1} parent=1 // pred_check_branch
      %192 = sbr.rel (0) target = $region25
    $region24: #{tpu_custom_call.1} parent=1 // pred_region
      %s194 = ssub.s32 16, 16
      %195 = vsyncadd [#allocation8], %s194
      %s197 = sshll.u32 [#allocation7], 4
      %s198 = int_to_ptr.vmem [resolvable:$true] %s197
      %200 = dma.vmem_to_hbm [thread:$0]  %s198, 16, %s6, [#allocation8]
    $region25: #{tpu_custom_call.1} parent=1 // pred_fallthru
      _
    // Predicated region
    $region26: #{tpu_custom_call.1} parent=1 // pred_check
      _
    $region27: #{tpu_custom_call.1} parent=1 // pred_check_branch
      %202 = sbr.rel (0) target = $region29
    $region28: #{tpu_custom_call.1} parent=1 // pred_region
      %203 = dma.done [#allocation8], 16
    $region29: #{tpu_custom_call.1} parent=1 // pred_fallthru
      _
    %204 = vsyncpa [#allocation8], 1

</llo_original>
